<compile_context>
chip_gen: v5e
topology: v5e:2x2
jax: 0.10.0
libtpu: 0.0.40
codegen_flags: <defaults>
</compile_context>

<pallas_src>
import functools

import jax
import jax.numpy as jnp
from jax.experimental import pallas as pl
from jax.experimental.pallas import tpu as pltpu


def _round_up(x: int, m: int) -> int:
    return ((x + m - 1) // m) * m


def _pick_batch_tile(A: int, tile_b: int) -> int:
    """Per-step batch tile.

    - Small A: one full-extent block (latency path; block dim == full dim is legal).
    - Mid A (1024 < A <= tile_b): split into 2 blocks so both v7x TensorCores share
      the bandwidth-bound work (harmless on v5e/v6e).
    - Large A: tile_b-row tiles (multiple of 8 -> sublane aligned).
    """
    if A <= tile_b:
        if A > 1024:
            return _round_up(-(-A // 2), 8)
        return A
    return tile_b


def _inventory_encoder_kernel(x_ref, w_ref, b_ref, o_ref):
    # x_ref: (tb, K)   w_ref: (K, I)   b_ref: (1, I)   o_ref: (tb, I)
    # Standard (K-contracting) matmul on a pre-transposed weight: MXU-native RHS
    # layout on all generations, f32 accumulation regardless of input dtype.
    y = jnp.dot(x_ref[...], w_ref[...], preferred_element_type=jnp.float32)
    o_ref[...] = (y + b_ref[...]).astype(o_ref.dtype)


@functools.partial(jax.jit, static_argnames=("tile_b",))
def inventory_encoder_forward(inventory, weight, bias, *, tile_b=2048):
    """Pallas implementation of InventoryEncoder.forward.

    inventory: (agents, items, hidden)       float32 (or bf16 if cast upstream)
    weight:    (input_size, items*hidden)    PyTorch nn.Linear layout
    bias:      (input_size,)
    returns    (agents, input_size)
    """
    A, items, hidden = inventory.shape
    K = items * hidden
    I, K2 = weight.shape
    assert K == K2, f"weight in_features {K2} != items*hidden {K}"

    # Flatten (view) — free on a contiguous row-major array.
    x = inventory.reshape(A, K)

    # One-time weight transpose to (K, I): guarantees the MXU sees a native
    # (K, N) RHS; no per-step XLU transpose in the kernel.
    # TODO(synk): in production hoist this (and any bf16 cast) into parameter prep.
    w_t = weight.T
    b2 = bias.reshape(1, I)

    tb = _pick_batch_tile(A, tile_b)
    grid = (pl.cdiv(A, tb),)

    # Scoped-VMEM budget from the actual tile footprint (x/out double-buffered,
    # W/b resident but conservatively counted twice), with 2x headroom,
    # clamped to stay inside v7x's 64 MiB physical VMEM per TC.
    act_bytes = jnp.dtype(inventory.dtype).itemsize
    par_bytes = jnp.dtype(weight.dtype).itemsize
    vmem_need = 2 * tb * (K + I) * act_bytes + 2 * (K * I + I) * par_bytes
    vmem_limit = int(min(max(2 * vmem_need, 16 << 20), 48 << 20))

    cost = pl.CostEstimate(
        flops=2 * A * K * I,
        transcendentals=0,
        bytes_accessed=act_bytes * A * (K + I) + par_bytes * (K * I + I),
    )

    out = pl.pallas_call(
        _inventory_encoder_kernel,
        out_shape=jax.ShapeDtypeStruct((A, I), inventory.dtype),
        grid_spec=pltpu.PrefetchScalarGridSpec(
            num_scalar_prefetch=0,
            grid=grid,
            in_specs=[
                pl.BlockSpec((tb, K), lambda i: (i, 0)),   # activations: tiled over batch
                pl.BlockSpec((K, I), lambda i: (0, 0)),    # weight: resident across grid
                pl.BlockSpec((1, I), lambda i: (0, 0)),    # bias: resident across grid
            ],
            # Unpadded output block: last dim == full array dim is legal; avoids the
            # padded-output + wrapper-slice HBM round trip.
            out_specs=pl.BlockSpec((tb, I), lambda i: (i, 0)),
        ),
        compiler_params=pltpu.CompilerParams(
            dimension_semantics=("parallel",),
            vmem_limit_bytes=vmem_limit,
        ),
        cost_estimate=cost,
    )(x, w_t, b2)

    return out


if __name__ == "__main__":
    # Shapes consistent with InventoryEncoder(input_size, hidden_size):
    # forward requires items == 12 and hidden == hidden_size.
    agents = 4
    items = 12
    hidden_size = 32
    input_size = 64

    key = jax.random.PRNGKey(0)
    k_inv, k_w, k_b = jax.random.split(key, 3)

    inventory = jax.random.normal(k_inv, (agents, items, hidden_size), dtype=jnp.float32)
    weight = jax.random.normal(
        k_w, (input_size, items * hidden_size), dtype=jnp.float32) * 0.05
    bias = jax.random.normal(k_b, (input_size,), dtype=jnp.float32) * 0.05

    out = inventory_encoder_forward(inventory, weight, bias)
    out = jax.block_until_ready(out)

    # Reference: same math as PyTorch nn.Linear on the flattened inventory.
    ref = inventory.reshape(agents, items * hidden_size) @ weight.T + bias
    assert out.shape == (agents, input_size)
    assert jnp.allclose(out, ref, atol=1e-5, rtol=1e-5)

    print("KERNEL_OK")
</pallas_src>

<mosaic_0001>
module attributes {stable_mosaic.version = 11 : i64} {
  func.func @_inventory_encoder_kernel(%arg0: i32, %arg1: memref<4x384xf32, #tpu.memory_space<vmem>>, %arg2: memref<384x64xf32, #tpu.memory_space<vmem>>, %arg3: memref<1x64xf32, #tpu.memory_space<vmem>>, %arg4: memref<4x64xf32, #tpu.memory_space<vmem>>) attributes {dimension_semantics = [#tpu.dimension_semantics<parallel>], iteration_bounds = array<i64: 1>, scalar_prefetch = 0 : i64, scratch_operands = 0 : i64, tpu.core_type = #tpu.core_type<tc>, window_params = [{transform_indices = @transform_0, window_bounds = array<i64: 4, 384>}, {pipeline_mode = #tpu.pipeline_mode<synchronous>, transform_indices = @transform_1, window_bounds = array<i64: 384, 64>}, {pipeline_mode = #tpu.pipeline_mode<synchronous>, transform_indices = @transform_2, window_bounds = array<i64: 1, 64>}, {transform_indices = @transform_3, window_bounds = array<i64: 4, 64>}]} {
    %c0 = arith.constant 0 : index
    %c0_0 = arith.constant 0 : index
    %0 = vector.load %arg1[%c0, %c0_0] : memref<4x384xf32, #tpu.memory_space<vmem>>, vector<4x384xf32>
    %c0_1 = arith.constant 0 : index
    %c0_2 = arith.constant 0 : index
    %1 = vector.load %arg2[%c0_1, %c0_2] : memref<384x64xf32, #tpu.memory_space<vmem>>, vector<384x64xf32>
    %cst = arith.constant dense<0.000000e+00> : vector<4x64xf32>
    %2 = tpu.matmul %0, %1, %cst {dimension_numbers = #tpu.dot_dimension_numbers<[1], [0], [0], [1], [0, 0, 1, 1], [], []>} : vector<4x384xf32>, vector<384x64xf32>, vector<4x64xf32> -> vector<4x64xf32>
    %c0_3 = arith.constant 0 : index
    %c0_4 = arith.constant 0 : index
    %3 = vector.load %arg3[%c0_3, %c0_4] : memref<1x64xf32, #tpu.memory_space<vmem>>, vector<1x64xf32>
    %4 = vector.broadcast %3 : vector<1x64xf32> to vector<4x64xf32>
    %5 = arith.addf %2, %4 : vector<4x64xf32>
    %c0_5 = arith.constant 0 : index
    %c0_6 = arith.constant 0 : index
    %6 = vector.load %arg4[%c0_5, %c0_6] : memref<4x64xf32, #tpu.memory_space<vmem>>, vector<4x64xf32>
    tpu.vector_store %arg4[%c0_5, %c0_6], %5 {strides = array<i32>} : memref<4x64xf32, #tpu.memory_space<vmem>>, vector<4x64xf32>,
    return
  }
  func.func @transform_0(%arg0: i32) -> (i32, i32) {
    %c0_i32 = arith.constant 0 : i32
    %c0_i32_0 = arith.constant 0 : i32
    return %arg0, %c0_i32 : i32, i32
  }
  func.func @transform_1(%arg0: i32) -> (i32, i32) {
    %c0_i32 = arith.constant 0 : i32
    %c0_i32_0 = arith.constant 0 : i32
    %c0_i32_1 = arith.constant 0 : i32
    return %c0_i32, %c0_i32_0 : i32, i32
  }
  func.func @transform_2(%arg0: i32) -> (i32, i32) {
    %c0_i32 = arith.constant 0 : i32
    %c0_i32_0 = arith.constant 0 : i32
    %c0_i32_1 = arith.constant 0 : i32
    return %c0_i32, %c0_i32_0 : i32, i32
  }
  func.func @transform_3(%arg0: i32) -> (i32, i32) {
    %c0_i32 = arith.constant 0 : i32
    %c0_i32_0 = arith.constant 0 : i32
    return %arg0, %c0_i32 : i32, i32
  }
}

</mosaic_0001>

<llo_original>
// kernel: inventory_encoder_forward.1
$region0: #{inventory_encoder_forward.1}
  #allocation0 [shape = 'u32[]', space=smem, size = 0x4, offset = 0x4, fixed_abs, tag = 'smem constant byte address 0x4 - core index']
  #allocation1 [shape = 'u32[72,128]{1,0:T(1,128)}', space=vmem, size = 0x9000, scoped, tag = 'internal scratch']
  %s0 = inlined_call_operand.vmem [shape: f32[4,384], index: 0, kind: input, shape index: {}]
  %s1 = inlined_call_operand.vmem [shape: f32[384,64], index: 1, kind: input, shape index: {}]
  %s2 = inlined_call_operand.vmem [shape: f32[1,64], index: 2, kind: input, shape index: {}]
  %s3 = inlined_call_operand.hbm [shape: f32[4,64], index: 3, kind: output, shape index: {}]
  %s4 = sld [smem:[#allocation0]]
  $region22: #{inventory_encoder_forward.1} parent=0
    _
  %s6 = ssub.s32 1, %s4
  %s7 = scalar_select 0, %s6, %s4
  $region1: #{inventory_encoder_forward.1} parent=0
    #allocation2 [shape = 'u8[2048]{0}', space=vmem, size = 0x800, scoped, tag = 'output window, operand 0, single buffered']
    #allocation3 [shape = 's32[1]{0}', space=sflag, size = 0x4, scoped, tag = 'scoped memory for inventory_encoder_forward.1']
    %8 = vsyncpa [#allocation3], 0
    // Predicated region
    $region2: #{inventory_encoder_forward.1} parent=1 // pred_check
      _
    $region3: #{inventory_encoder_forward.1} parent=1 // pred_check_branch
      %10 = sbr.rel (0) target = $region5
    $region4: #{inventory_encoder_forward.1} parent=1 // pred_region
      _
    $region5: #{inventory_encoder_forward.1} parent=1 // pred_fallthru
      _
    // Predicated region
    $region6: #{inventory_encoder_forward.1} parent=1 // pred_check
      _
    $region7: #{inventory_encoder_forward.1} parent=1 // pred_check_branch
      %12 = sbr.rel (0) target = $region9
    $region8: #{inventory_encoder_forward.1} parent=1 // pred_region
      _
    $region9: #{inventory_encoder_forward.1} parent=1 // pred_fallthru
      _
    // Predicated region
    $region10: #{inventory_encoder_forward.1} parent=1 // pred_check
      _
    $region11: #{inventory_encoder_forward.1} parent=1 // pred_check_branch
      %14 = sbr.rel (0) target = $region13
    $region12: #{inventory_encoder_forward.1} parent=1 // pred_region
      _
    $region13: #{inventory_encoder_forward.1} parent=1 // pred_fallthru
      _
    %v15 = vld [vmem:[%s0] sm:$0xff]
    %v16 = vld [vmem:[%s0 + $0x8] sm:$0xf]
    %v17 = vld [vmem:[%s1] sm:$0xff]
    %v18 = vld [vmem:[%s1 + $0x8] sm:$0xff]
    %v19 = vld [vmem:[%s1 + $0x10] sm:$0xff]
    %v20 = vld [vmem:[%s1 + $0x18] sm:$0xff]
    %v21 = vld [vmem:[%s1 + $0x20] sm:$0xff]
    %v22 = vld [vmem:[%s1 + $0x28] sm:$0xff]
    %v23 = vld [vmem:[%s1 + $0x30] sm:$0xff]
    %v24 = vld [vmem:[%s1 + $0x38] sm:$0xff]
    %v25 = vld [vmem:[%s1 + $0x40] sm:$0xff]
    %v26 = vld [vmem:[%s1 + $0x48] sm:$0xff]
    %v27 = vld [vmem:[%s1 + $0x50] sm:$0xff]
    %v28 = vld [vmem:[%s1 + $0x58] sm:$0xff]
    %v29 = vld [vmem:[%s1 + $0x60] sm:$0xff]
    %v30 = vld [vmem:[%s1 + $0x68] sm:$0xff]
    %v31 = vld [vmem:[%s1 + $0x70] sm:$0xff]
    %v32 = vld [vmem:[%s1 + $0x78] sm:$0xff]
    %v33 = vld [vmem:[%s1 + $0x80] sm:$0xff]
    %v34 = vld [vmem:[%s1 + $0x88] sm:$0xff]
    %v35 = vld [vmem:[%s1 + $0x90] sm:$0xff]
    %v36 = vld [vmem:[%s1 + $0x98] sm:$0xff]
    %v37 = vld [vmem:[%s1 + $0xa0] sm:$0xff]
    %v38 = vld [vmem:[%s1 + $0xa8] sm:$0xff]
    %v39 = vld [vmem:[%s1 + $0xb0] sm:$0xff]
    %v40 = vld [vmem:[%s1 + $0xb8] sm:$0xff]
    %v41 = vld [vmem:[%s1 + $0xc0] sm:$0xff]
    %v42 = vld [vmem:[%s1 + $0xc8] sm:$0xff]
    %v43 = vld [vmem:[%s1 + $0xd0] sm:$0xff]
    %v44 = vld [vmem:[%s1 + $0xd8] sm:$0xff]
    %v45 = vld [vmem:[%s1 + $0xe0] sm:$0xff]
    %v46 = vld [vmem:[%s1 + $0xe8] sm:$0xff]
    %v47 = vld [vmem:[%s1 + $0xf0] sm:$0xff]
    %v48 = vld [vmem:[%s1 + $0xf8] sm:$0xff]
    %v49 = vld [vmem:[%s1 + $0x100] sm:$0xff]
    %v50 = vld [vmem:[%s1 + $0x108] sm:$0xff]
    %v51 = vld [vmem:[%s1 + $0x110] sm:$0xff]
    %v52 = vld [vmem:[%s1 + $0x118] sm:$0xff]
    %v53 = vld [vmem:[%s1 + $0x120] sm:$0xff]
    %v54 = vld [vmem:[%s1 + $0x128] sm:$0xff]
    %v55 = vld [vmem:[%s1 + $0x130] sm:$0xff]
    %v56 = vld [vmem:[%s1 + $0x138] sm:$0xff]
    %v57 = vld [vmem:[%s1 + $0x140] sm:$0xff]
    %v58 = vld [vmem:[%s1 + $0x148] sm:$0xff]
    %v59 = vld [vmem:[%s1 + $0x150] sm:$0xff]
    %v60 = vld [vmem:[%s1 + $0x158] sm:$0xff]
    %v61 = vld [vmem:[%s1 + $0x160] sm:$0xff]
    %v62 = vld [vmem:[%s1 + $0x168] sm:$0xff]
    %v63 = vld [vmem:[%s1 + $0x170] sm:$0xff]
    %v64 = vld [vmem:[%s1 + $0x178] sm:$0xff]
    %v65 = vld [vmem:[%s2] sm:$0x1]
    %v67 = vperm.slane %v65, 0
    %71 = vst [vmem:[#allocation1] ss:$2 sm:$0xff] %v15
    %s72 = scalar_lea.vmem [#allocation1], 16
    %73 = vst [vmem:[%s72] ss:$2 sm:$0xff] %v16
    %v74 = vld.sshfl [vmem:[#allocation1] sm:$0xff pattern:$0x75316420]
    %v75 = vld.sshfl [vmem:[#allocation1 + $0x8] sm:$0xff pattern:$0x75316420]
    %v76 = vld.sshfl [vmem:[#allocation1 + $0x10] sm:$0xff pattern:$0x75316420]
    %80 = vmatpush.msra.mxu0 %v32
    %81 = vmatpush.msra.mxu0 %v31
    %82 = vmatpush.msra.mxu0 %v30
    %83 = vmatpush.msra.mxu0 %v29
    %84 = vmatpush.msra.mxu0 %v28
    %85 = vmatpush.msra.mxu0 %v27
    %86 = vmatpush.msra.mxu0 %v26
    %87 = vmatpush.msra.mxu0 %v25
    %88 = vmatpush.msra.mxu0 %v24
    %89 = vmatpush.msra.mxu0 %v23
    %90 = vmatpush.msra.mxu0 %v22
    %91 = vmatpush.msra.mxu0 %v21
    %92 = vmatpush.msra.mxu0 %v20
    %93 = vmatpush.msra.mxu0 %v19
    %94 = vmatpush.msra.mxu0 %v18
    %95 = vmatpush.msra.mxu0 %v17
    %96 = vmatmul.f32.gmra.mxu0 %v74
    %v97 = vpop.f32.mrf.mxu0
    %v98 = vadd.f32 %v67, %v97
    %99 = vdwg.mxu0
    %100 = vmatpush.msra.mxu0 %v48
    %101 = vmatpush.msra.mxu0 %v47
    %102 = vmatpush.msra.mxu0 %v46
    %103 = vmatpush.msra.mxu0 %v45
    %104 = vmatpush.msra.mxu0 %v44
    %105 = vmatpush.msra.mxu0 %v43
    %106 = vmatpush.msra.mxu0 %v42
    %107 = vmatpush.msra.mxu0 %v41
    %108 = vmatpush.msra.mxu0 %v40
    %109 = vmatpush.msra.mxu0 %v39
    %110 = vmatpush.msra.mxu0 %v38
    %111 = vmatpush.msra.mxu0 %v37
    %112 = vmatpush.msra.mxu0 %v36
    %113 = vmatpush.msra.mxu0 %v35
    %114 = vmatpush.msra.mxu0 %v34
    %115 = vmatpush.msra.mxu0 %v33
    %116 = vmatmul.f32.gmra.mxu0 %v75
    %v117 = vpop.f32.mrf.mxu0
    %v118 = vadd.f32 %v98, %v117
    %119 = vdwg.mxu0
    %120 = vmatpush.msra.mxu0 %v64
    %121 = vmatpush.msra.mxu0 %v63
    %122 = vmatpush.msra.mxu0 %v62
    %123 = vmatpush.msra.mxu0 %v61
    %124 = vmatpush.msra.mxu0 %v60
    %125 = vmatpush.msra.mxu0 %v59
    %126 = vmatpush.msra.mxu0 %v58
    %127 = vmatpush.msra.mxu0 %v57
    %128 = vmatpush.msra.mxu0 %v56
    %129 = vmatpush.msra.mxu0 %v55
    %130 = vmatpush.msra.mxu0 %v54
    %131 = vmatpush.msra.mxu0 %v53
    %132 = vmatpush.msra.mxu0 %v52
    %133 = vmatpush.msra.mxu0 %v51
    %134 = vmatpush.msra.mxu0 %v50
    %135 = vmatpush.msra.mxu0 %v49
    %136 = vmatmul.f32.gmra.mxu0 %v76
    %v137 = vpop.f32.mrf.mxu0
    %v138 = vadd.f32 %v118, %v137
    %139 = vdwg.mxu0
    %vm140 = vcmask 519168
    %141 = vst.msk [vmem:[#allocation2] sm:$0xf] %vm140, %v138
    // Predicated region
    $region14: #{inventory_encoder_forward.1} parent=1 // pred_check
      _
    $region15: #{inventory_encoder_forward.1} parent=1 // pred_check_branch
      %143 = sbr.rel (0) target = $region17
    $region16: #{inventory_encoder_forward.1} parent=1 // pred_region
      %145 = vsyncadd [#allocation3], 0
      %s147 = sshll.u32 [#allocation2], 4
      %s148 = int_to_ptr.vmem [resolvable:$true] %s147
      %s149 = sshll.u32 %s3, 4
      %s150 = int_to_ptr.hbm [resolvable:$true] %s149
      %152 = dma.vmem_to_hbm [thread:$0]  %s148, 64, %s150, [#allocation3]
    $region17: #{inventory_encoder_forward.1} parent=1 // pred_fallthru
      _
    // Predicated region
    $region18: #{inventory_encoder_forward.1} parent=1 // pred_check
      _
    $region19: #{inventory_encoder_forward.1} parent=1 // pred_check_branch
      %154 = sbr.rel (0) target = $region21
    $region20: #{inventory_encoder_forward.1} parent=1 // pred_region
      %156 = dma.done [#allocation3], 64
    $region21: #{inventory_encoder_forward.1} parent=1 // pred_fallthru
      _
    %157 = vsyncpa [#allocation3], 1

</llo_original>
